<compile_context>
chip_gen: v5e
topology: v5e:2x2
jax: 0.10.0
libtpu: 0.0.40
codegen_flags: <defaults>
</compile_context>

<pallas_src>
import functools

import jax
import jax.numpy as jnp
from jax.experimental import pallas as pl
from jax.experimental.pallas import tpu as pltpu

_LANES = 128
_SUBLANES = 8


def _per_row_focal(logits_ref, targets_ref, *, alpha, gamma, n_valid, tile_n, needs_mask):
    """Per-row focal loss for the current (TILE_N, C) block; padded rows -> 0."""
    logits = logits_ref[...].astype(jnp.float32)                 # (TILE_N, C)
    targets = targets_ref[...]                                   # (TILE_N, 1) int32

    # Numerically stable softmax pieces; exp(shifted) is computed once and reused.
    m = jnp.max(logits, axis=-1, keepdims=True)                  # (TILE_N, 1)
    e = jnp.exp(logits - m)                                      # (TILE_N, C)  (EUP)

    col_ids = jax.lax.broadcasted_iota(jnp.int32, logits.shape, 1)
    onehot = (col_ids == targets).astype(jnp.float32)            # (TILE_N, C)

    sum_e = jnp.sum(e, axis=-1, keepdims=True)                   # softmax denominator
    tgt_e = jnp.sum(e * onehot, axis=-1, keepdims=True)          # exp(tgt_logit - m)
    tgt_logit = jnp.sum(logits * onehot, axis=-1, keepdims=True)

    # ce = logsumexp(logits) - logits[target]
    ce = jnp.log(sum_e) + m - tgt_logit
    # pt = softmax(logits)[target] == exp(-ce), without an extra per-row exp.
    pt = tgt_e * pl.reciprocal(sum_e, approx=True)

    # Clamp: approx reciprocal / rounding can push pt slightly above 1.
    one_minus_pt = jnp.maximum(1.0 - pt, 0.0)

    g = float(gamma)
    if g == int(g) and 0 <= int(g) <= 8:
        # Integer gamma (default 2): multiply chain on the VPU, no exp/log on EUP.
        w = jnp.ones_like(one_minus_pt)
        for _ in range(int(g)):
            w = w * one_minus_pt
    else:
        w = one_minus_pt ** g

    focal = alpha * w * ce                                       # (TILE_N, 1)

    if needs_mask:
        # Last block may extend past N; zero padded rows so they do not pollute
        # the reduction (out-of-bounds block contents are unspecified).
        row = (jax.lax.broadcasted_iota(jnp.int32, (tile_n, 1), 0)
               + pl.program_id(0) * tile_n)
        focal = jnp.where(row < n_valid, focal, 0.0)
    return focal


def _focal_partial_sum_kernel(logits_ref, targets_ref, out_ref, **kw):
    focal = _per_row_focal(logits_ref, targets_ref, **kw)
    # Lane-dense, unmasked store of this block's partial sum (splat across 8x128).
    block_sum = jnp.sum(focal).reshape(1, 1, 1)
    out_ref[...] = jnp.broadcast_to(block_sum, out_ref.shape)


def _focal_per_row_kernel(logits_ref, targets_ref, out_ref, **kw):
    # TODO(synk): a lane-dense (num_blocks, TILE_N) layout would avoid masked vst
    # on this lane-width-1 output; kept (TILE_N, 1) for simple, safe lowering.
    out_ref[...] = _per_row_focal(logits_ref, targets_ref, **kw)


def _round_up(x, m):
    return ((x + m - 1) // m) * m


def _choose_tile_n(n, c, itemsize, per_buffer_bytes=4 * 1024 * 1024, max_tile=1024):
    """Rows per grid step: large enough to amortize per-step overhead, small enough
    that the double-buffered logits tile fits scoped VMEM on every generation
    (v5e 16 MiB default scoped, v6e 128 MiB, v7x 64 MiB physical)."""
    rows = per_buffer_bytes // max(1, c * itemsize)
    rows = max(_SUBLANES, min(rows, max_tile, _round_up(n, _SUBLANES)))
    return max(_SUBLANES, (rows // _SUBLANES) * _SUBLANES)


def focal_loss(logits, targets, alpha=1.0, gamma=2.0, reduction="mean", tile_n=None):
    """Pallas-backed FocalLoss forward. logits: (N, C); targets: (N,) int class ids."""
    if reduction not in ("mean", "sum", "none"):
        raise ValueError(f"unsupported reduction: {reduction!r}")
    n, c = logits.shape
    targets2d = targets.reshape(n, 1).astype(jnp.int32)
    itemsize = jnp.dtype(logits.dtype).itemsize

    if tile_n is None:
        tile_n = _choose_tile_n(n, c, itemsize)
    if tile_n % _SUBLANES:
        raise ValueError("tile_n must be a multiple of 8")
    num_blocks = pl.cdiv(n, tile_n)
    needs_mask = (num_blocks * tile_n != n)

    # TODO(synk): for vocab-sized C, add a second ("arbitrary") grid axis over C
    # with an online-softmax running max / sum-exp; here C fits one block.
    in_specs = [
        pl.BlockSpec((tile_n, c), lambda i: (i, 0)),   # logits tile (native dtype)
        pl.BlockSpec((tile_n, 1), lambda i: (i, 0)),   # target class ids
    ]
    cost = pl.CostEstimate(
        flops=8 * n * c,
        transcendentals=n * c + 3 * n,                 # tile exp + per-row log/recip
        bytes_accessed=n * c * itemsize + n * 4 + n * 4,
    )
    cparams = pltpu.CompilerParams(
        dimension_semantics=("parallel",),             # independent blocks (v7x: both TCs)
        vmem_limit_bytes=32 * 1024 * 1024,
    )
    kw = dict(alpha=float(alpha), gamma=float(gamma), n_valid=n,
              tile_n=tile_n, needs_mask=needs_mask)

    if reduction in ("mean", "sum"):
        partial_sums = pl.pallas_call(
            functools.partial(_focal_partial_sum_kernel, **kw),
            grid=(num_blocks,),
            out_shape=jax.ShapeDtypeStruct((num_blocks, _SUBLANES, _LANES), jnp.float32),
            in_specs=in_specs,
            out_specs=pl.BlockSpec((1, _SUBLANES, _LANES), lambda i: (i, 0, 0)),
            compiler_params=cparams,
            cost_estimate=cost,
        )(logits, targets2d)
        total = jnp.sum(partial_sums[:, 0, 0])
        return total / n if reduction == "mean" else total

    per_row = pl.pallas_call(
        functools.partial(_focal_per_row_kernel, **kw),
        grid=(num_blocks,),
        out_shape=jax.ShapeDtypeStruct((num_blocks * tile_n, 1), jnp.float32),
        in_specs=in_specs,
        out_specs=pl.BlockSpec((tile_n, 1), lambda i: (i, 0)),
        compiler_params=cparams,
        cost_estimate=cost,
    )(logits, targets2d)
    return per_row[:n, 0]


def _reference_focal_rows(logits, targets, alpha, gamma):
    """Pure-JAX per-row focal loss mirroring the PyTorch module (f32)."""
    lse = jax.nn.logsumexp(logits, axis=-1)
    tgt = jnp.take_along_axis(logits, targets[:, None], axis=-1)[:, 0]
    ce = lse - tgt
    pt = jnp.exp(-ce)
    return alpha * (1.0 - pt) ** gamma * ce


if __name__ == "__main__":
    key = jax.random.PRNGKey(0)
    k1, k2, k3, k4 = jax.random.split(key, 4)

    # Tolerances are loose because the kernel uses the EUP approximate reciprocal.
    RTOL, ATOL = 2e-2, 1e-3

    # --- Case 1: bf16 logits, multi-block grid (N divisible by the tile) ---
    N1, C1 = 64, 16
    logits1 = jax.random.normal(k1, (N1, C1), dtype=jnp.float32).astype(jnp.bfloat16)
    targets1 = jax.random.randint(k2, (N1,), 0, C1, dtype=jnp.int32)

    loss_mean = focal_loss(logits1, targets1, alpha=1.0, gamma=2.0, reduction="mean", tile_n=16)
    loss_sum = focal_loss(logits1, targets1, alpha=0.25, gamma=2.0, reduction="sum", tile_n=16)
    loss_none = focal_loss(logits1, targets1, alpha=1.0, gamma=2.0, reduction="none", tile_n=16)
    jax.block_until_ready((loss_mean, loss_sum, loss_none))

    rows1 = _reference_focal_rows(logits1.astype(jnp.float32), targets1, 1.0, 2.0)
    rows1a = _reference_focal_rows(logits1.astype(jnp.float32), targets1, 0.25, 2.0)
    assert loss_none.shape == (N1,), loss_none.shape
    assert jnp.allclose(loss_mean, jnp.mean(rows1), rtol=RTOL, atol=ATOL), (loss_mean, jnp.mean(rows1))
    assert jnp.allclose(loss_sum, jnp.sum(rows1a), rtol=RTOL, atol=ATOL), (loss_sum, jnp.sum(rows1a))
    assert jnp.allclose(loss_none, rows1, rtol=RTOL, atol=ATOL)

    # --- Case 2: f32 logits, N not a multiple of the tile (padded rows masked) ---
    N2, C2 = 50, 24
    logits2 = jax.random.normal(k3, (N2, C2), dtype=jnp.float32)
    targets2 = jax.random.randint(k4, (N2,), 0, C2, dtype=jnp.int32)
    loss2 = focal_loss(logits2, targets2, alpha=1.0, gamma=2.0, reduction="mean", tile_n=16)
    loss2 = jax.block_until_ready(loss2)
    rows2 = _reference_focal_rows(logits2, targets2, 1.0, 2.0)
    assert jnp.allclose(loss2, jnp.mean(rows2), rtol=RTOL, atol=ATOL), (loss2, jnp.mean(rows2))

    print("KERNEL_OK")
</pallas_src>

<mosaic_0001>
module attributes {stable_mosaic.version = 11 : i64} {
  func.func @_focal_partial_sum_kernel(%arg0: i32, %arg1: memref<16x16xbf16, #tpu.memory_space<vmem>>, %arg2: memref<16x1xi32, #tpu.memory_space<vmem>>, %arg3: memref<1x8x128xf32, #tpu.memory_space<vmem>>) attributes {dimension_semantics = [#tpu.dimension_semantics<parallel>], iteration_bounds = array<i64: 4>, scalar_prefetch = 0 : i64, scratch_operands = 0 : i64, tpu.core_type = #tpu.core_type<tc>, window_params = [{transform_indices = @transform_0, window_bounds = array<i64: 16, 16>}, {transform_indices = @transform_1, window_bounds = array<i64: 16, 1>}, {transform_indices = @transform_2, window_bounds = array<i64: 1, 8, 128>}]} {
    %c0 = arith.constant 0 : index
    %c0_0 = arith.constant 0 : index
    %0 = vector.load %arg1[%c0, %c0_0] : memref<16x16xbf16, #tpu.memory_space<vmem>>, vector<16x16xbf16>
    %1 = arith.extf %0 : vector<16x16xbf16> to vector<16x16xf32>
    %c0_1 = arith.constant 0 : index
    %c0_2 = arith.constant 0 : index
    %2 = vector.load %arg2[%c0_1, %c0_2] : memref<16x1xi32, #tpu.memory_space<vmem>>, vector<16x1xi32>
    %cst = arith.constant dense<0xFF800000> : vector<16xf32>
    %3 = vector.multi_reduction <maximumf>, %1, %cst [1] : vector<16x16xf32> to vector<16xf32>
    %4 = vector.shape_cast %3 : vector<16xf32> to vector<16x1xf32>
    %5 = vector.broadcast %4 : vector<16x1xf32> to vector<16x16xf32>
    %6 = arith.subf %1, %5 : vector<16x16xf32>
    %7 = math.exp %6 : vector<16x16xf32>
    %8 = tpu.iota {dimensions = array<i32: 1>} : vector<16x16xi32>
    %9 = vector.broadcast %2 : vector<16x1xi32> to vector<16x16xi32>
    %10 = arith.cmpi eq, %8, %9 : vector<16x16xi32>
    %11 = arith.extui %10 : vector<16x16xi1> to vector<16x16xi32>
    %12 = arith.sitofp %11 : vector<16x16xi32> to vector<16x16xf32>
    %cst_3 = arith.constant dense<0.000000e+00> : vector<16xf32>
    %13 = vector.multi_reduction <add>, %7, %cst_3 [1] : vector<16x16xf32> to vector<16xf32>
    %14 = vector.shape_cast %13 : vector<16xf32> to vector<16x1xf32>
    %15 = arith.mulf %7, %12 : vector<16x16xf32>
    %cst_4 = arith.constant dense<0.000000e+00> : vector<16xf32>
    %16 = vector.multi_reduction <add>, %15, %cst_4 [1] : vector<16x16xf32> to vector<16xf32>
    %17 = vector.shape_cast %16 : vector<16xf32> to vector<16x1xf32>
    %18 = arith.mulf %1, %12 : vector<16x16xf32>
    %cst_5 = arith.constant dense<0.000000e+00> : vector<16xf32>
    %19 = vector.multi_reduction <add>, %18, %cst_5 [1] : vector<16x16xf32> to vector<16xf32>
    %20 = vector.shape_cast %19 : vector<16xf32> to vector<16x1xf32>
    %21 = math.log %14 : vector<16x1xf32>
    %22 = arith.addf %21, %4 : vector<16x1xf32>
    %23 = arith.subf %22, %20 : vector<16x1xf32>
    %24 = tpu.reciprocal %14 {approx = true} : vector<16x1xf32> -> vector<16x1xf32>
    %25 = arith.mulf %17, %24 : vector<16x1xf32>
    %cst_6 = arith.constant 1.000000e+00 : f32
    %26 = vector.broadcast %cst_6 : f32 to vector<16x1xf32>
    %27 = arith.subf %26, %25 : vector<16x1xf32>
    %cst_7 = arith.constant 0.000000e+00 : f32
    %28 = vector.broadcast %cst_7 : f32 to vector<16x1xf32>
    %29 = arith.maximumf %27, %28 : vector<16x1xf32>
    %cst_8 = arith.constant 1.000000e+00 : f32
    %30 = vector.broadcast %cst_8 : f32 to vector<16x1xf32>
    %31 = arith.mulf %30, %29 : vector<16x1xf32>
    %32 = arith.mulf %31, %29 : vector<16x1xf32>
    %cst_9 = arith.constant 1.000000e+00 : f32
    %33 = vector.broadcast %cst_9 : f32 to vector<16x1xf32>
    %34 = arith.mulf %33, %32 : vector<16x1xf32>
    %35 = arith.mulf %34, %23 : vector<16x1xf32>
    %36 = vector.shape_cast %35 : vector<16x1xf32> to vector<1x16x1xf32>
    %cst_10 = arith.constant dense<0.000000e+00> : vector<1xf32>
    %37 = vector.multi_reduction <add>, %36, %cst_10 [1, 2] : vector<1x16x1xf32> to vector<1xf32>
    %38 = vector.shape_cast %37 : vector<1xf32> to vector<1x1x1xf32>
    %39 = vector.extract %38[0, 0, 0] : f32 from vector<1x1x1xf32>
    %40 = vector.broadcast %39 : f32 to vector<1x1x1xf32>
    %41 = vector.shape_cast %40 : vector<1x1x1xf32> to vector<1x1x1xf32>
    %42 = vector.broadcast %41 : vector<1x1x1xf32> to vector<1x8x128xf32>
    %c0_11 = arith.constant 0 : index
    %c0_12 = arith.constant 0 : index
    %c0_13 = arith.constant 0 : index
    %43 = vector.load %arg3[%c0_11, %c0_12, %c0_13] : memref<1x8x128xf32, #tpu.memory_space<vmem>>, vector<1x8x128xf32>
    tpu.vector_store %arg3[%c0_11, %c0_12, %c0_13], %42 {strides = array<i32>} : memref<1x8x128xf32, #tpu.memory_space<vmem>>, vector<1x8x128xf32>,
    return
  }
  func.func @transform_0(%arg0: i32) -> (i32, i32) {
    %c0_i32 = arith.constant 0 : i32
    %c0_i32_0 = arith.constant 0 : i32
    return %arg0, %c0_i32 : i32, i32
  }
  func.func @transform_1(%arg0: i32) -> (i32, i32) {
    %c0_i32 = arith.constant 0 : i32
    %c0_i32_0 = arith.constant 0 : i32
    return %arg0, %c0_i32 : i32, i32
  }
  func.func @transform_2(%arg0: i32) -> (i32, i32, i32) {
    %c0_i32 = arith.constant 0 : i32
    %c0_i32_0 = arith.constant 0 : i32
    %c0_i32_1 = arith.constant 0 : i32
    return %arg0, %c0_i32, %c0_i32_0 : i32, i32, i32
  }
}

</mosaic_0001>

<llo_original>
// kernel: tpu_custom_call.1
$region0: #{tpu_custom_call.1}
  #allocation0 [shape = 'u32[]', space=smem, size = 0x4, offset = 0x4, fixed_abs, tag = 'smem constant byte address 0x4 - core index']
  #allocation1 [shape = 'u32[72,128]{1,0:T(1,128)}', space=vmem, size = 0x9000, scoped, tag = 'internal scratch']
  %s0 = inlined_call_operand.vmem [shape: bf16[64,16], index: 0, kind: input, shape index: {}]
  %s1 = inlined_call_operand.vmem [shape: s32[64,1], index: 1, kind: input, shape index: {}]
  %s2 = inlined_call_operand.hbm [shape: f32[4,8,128], index: 2, kind: output, shape index: {}]
  %s3 = sld [smem:[#allocation0]]
  $region41: #{tpu_custom_call.1} parent=0
    _
  %s5 = ssub.s32 1, %s3
  %s6 = scalar_select 0, %s5, %s3
  $region1: #{tpu_custom_call.1} parent=0
    #allocation2 [shape = 'u8[8192]{0}', space=vmem, size = 0x2000, scoped, tag = 'output window, operand 0']
    #allocation3 [shape = 's32[2]{0}', space=sflag, size = 0x8, scoped, tag = 'scoped memory for tpu_custom_call.1']
    %7 = vsyncpa [#allocation3], 0
    %s8 = scalar_lea.sflag [#allocation3], 1
    %9 = vsyncpa %s8, 0
    loop: start=0, step=1, limit=6
    $region2: #{tpu_custom_call.1} parent=1 // loop_pre_header
      _
    $region3: #{tpu_custom_call.1} parent=1 // loop_header
      %s11 = sphi 0, %s15
      %p12 = scmp.ge.s32.totalorder %s11, 6
      %s21 = sphi 0, %s23
      %s24 = sphi 0, %s21
      %s25 = sphi 0, %s24
      %s41 = sphi 0, %s25
      %s47 = sphi 0, %s49
      %s50 = sphi 0, %s47
      %s51 = sphi 0, %s50
      %s67 = sphi 0, %s51
      %s73 = sphi 0, %s75
      %s76 = sphi 0, %s73
      %s77 = sphi 0, %s76
      %s93 = sphi 0, %s77
    $region4: #{tpu_custom_call.1} parent=1 // loop_header_branch
      %14 = sbr.rel (%p12) target = $region8
    $region5: #{tpu_custom_call.1} parent=1 // loop_body
      %s16 = ssub.s32 %s11, 1
      %s17 = ssub.s32 %s11, 2
      %s18 = sadd.s32 %s11, 1
      %s19 = ssub.s32 %s11, %s18
      %p20 = scmp.eq.s32.totalorder %s19, 0
      %s22 = sadd.s32 %s21, 1
      %s23 = scalar_select %p20, %s21, %s22
      %p26 = pneg %p20
      %p27 = scmp.eq.s32.totalorder %s11, 3
      %p28 = por %p26, %p27
      %p29 = scmp.ne.s32.totalorder %s21, %s24
      %p30 = scmp.eq.s32.totalorder %s11, 0
      %p31 = por %p29, %p30
      %p32 = scmp.ne.s32.totalorder %s21, %s24
      %p33 = scmp.eq.s32.totalorder %s16, 3
      %p34 = por %p32, %p33
      %p35 = scmp.ne.s32.totalorder %s24, %s25
      %p36 = scmp.eq.s32.totalorder %s16, 0
      %p37 = por %p35, %p36
      %p38 = scmp.ne.s32.totalorder %s24, %s25
      %p39 = scmp.eq.s32.totalorder %s17, 3
      %p40 = por %p38, %p39
      %p42 = scmp.ne.s32.totalorder %s25, %s41
      %p43 = scmp.eq.s32.totalorder %s17, 0
      %p44 = por %p42, %p43
      %s45 = ssub.s32 %s11, %s18
      %p46 = scmp.eq.s32.totalorder %s45, 0
      %s48 = sadd.s32 %s47, 1
      %s49 = scalar_select %p46, %s47, %s48
      %p52 = pneg %p46
      %p53 = scmp.eq.s32.totalorder %s11, 3
      %p54 = por %p52, %p53
      %p55 = scmp.ne.s32.totalorder %s47, %s50
      %p56 = scmp.eq.s32.totalorder %s11, 0
      %p57 = por %p55, %p56
      %p58 = scmp.ne.s32.totalorder %s47, %s50
      %p59 = scmp.eq.s32.totalorder %s16, 3
      %p60 = por %p58, %p59
      %p61 = scmp.ne.s32.totalorder %s50, %s51
      %p62 = scmp.eq.s32.totalorder %s16, 0
      %p63 = por %p61, %p62
      %p64 = scmp.ne.s32.totalorder %s50, %s51
      %p65 = scmp.eq.s32.totalorder %s17, 3
      %p66 = por %p64, %p65
      %p68 = scmp.ne.s32.totalorder %s51, %s67
      %p69 = scmp.eq.s32.totalorder %s17, 0
      %p70 = por %p68, %p69
      %s71 = ssub.s32 %s11, %s18
      %p72 = scmp.eq.s32.totalorder %s71, 0
      %s74 = sadd.s32 %s73, 1
      %s75 = scalar_select %p72, %s73, %s74
      %p78 = pneg %p72
      %p79 = scmp.eq.s32.totalorder %s11, 3
      %p80 = por %p78, %p79
      %p81 = scmp.ne.s32.totalorder %s73, %s76
      %p82 = scmp.eq.s32.totalorder %s11, 0
      %p83 = por %p81, %p82
      %p84 = scmp.ne.s32.totalorder %s73, %s76
      %p85 = scmp.eq.s32.totalorder %s16, 3
      %p86 = por %p84, %p85
      %p87 = scmp.ne.s32.totalorder %s76, %s77
      %p88 = scmp.eq.s32.totalorder %s16, 0
      %p89 = por %p87, %p88
      %p90 = scmp.ne.s32.totalorder %s76, %s77
      %p91 = scmp.eq.s32.totalorder %s17, 3
      %p92 = por %p90, %p91
      %p94 = scmp.ne.s32.totalorder %s77, %s93
      %p95 = scmp.eq.s32.totalorder %s17, 0
      %p96 = por %p94, %p95
      %p97 = scmp.le.s32.totalorder 1, %s11
      %p98 = scmp.lt.s32.totalorder %s11, 5
      %p99 = pnand %p97, %p98
      %p100 = pneg %p99
      // Predicated region
      $region9: #{tpu_custom_call.1} parent=5 // pred_check
        _
      $region10: #{tpu_custom_call.1} parent=5 // pred_check_branch
        %102 = sbr.rel (%p99) target = $region12
      $region11: #{tpu_custom_call.1} parent=5 // pred_region
        %s103 = ssub.s32 %s11, 1
      $region12: #{tpu_custom_call.1} parent=5 // pred_fallthru
        _
      %p104 = scmp.lt.s32.totalorder %s11, 4
      // Predicated region
      $region13: #{tpu_custom_call.1} parent=5 // pred_check
        %p105 = pneg %p104
      $region14: #{tpu_custom_call.1} parent=5 // pred_check_branch
        %107 = sbr.rel (%p105) target = $region16
      $region15: #{tpu_custom_call.1} parent=5 // pred_region
        // Predicated region
        $region17: #{tpu_custom_call.1} parent=15 // pred_check
          %p108 = pneg %p31
        $region18: #{tpu_custom_call.1} parent=15 // pred_check_branch
          %110 = sbr.rel (%p108) target = $region20
        $region19: #{tpu_custom_call.1} parent=15 // pred_region
          %s111 = smul.u32 2, %s11
          %p112 = scmp.lt.s32.totalorder %s111, 7
          %s113 = scalar_select %p112, %s111, 7
          %s114 = smul.addr %s113, 4
          %s115 = scalar_lea.vmem %s0, %s114
          %s116 = smul.u32 2, %s11
        $region20: #{tpu_custom_call.1} parent=15 // pred_fallthru
          _
        // Predicated region
        $region21: #{tpu_custom_call.1} parent=15 // pred_check
          %p117 = pneg %p57
        $region22: #{tpu_custom_call.1} parent=15 // pred_check_branch
          %119 = sbr.rel (%p117) target = $region24
        $region23: #{tpu_custom_call.1} parent=15 // pred_region
          %s120 = smul.u32 2, %s11
          %p121 = scmp.lt.s32.totalorder %s120, 7
          %s122 = scalar_select %p121, %s120, 7
          %s123 = smul.addr %s122, 8
          %s124 = scalar_lea.vmem %s1, %s123
          %s125 = smul.u32 2, %s11
        $region24: #{tpu_custom_call.1} parent=15 // pred_fallthru
          _
      $region16: #{tpu_custom_call.1} parent=5 // pred_fallthru
        _
      %p126 = scmp.le.s32.totalorder 1, %s11
      %p127 = scmp.lt.s32.totalorder %s11, 5
      %p128 = pnand %p126, %p127
      %p129 = pneg %p128
      // Predicated region
      $region25: #{tpu_custom_call.1} parent=5 // pred_check
        _
      $region26: #{tpu_custom_call.1} parent=5 // pred_check_branch
        %131 = sbr.rel (%p128) target = $region28
      $region27: #{tpu_custom_call.1} parent=5 // pred_region
        %s132 = ssub.s32 %s11, 1
        %s133 = smul.u32 2, %s16
        %p134 = scmp.lt.s32.totalorder %s133, 7
        %s135 = scalar_select %p134, %s133, 7
        %s136 = smul.addr %s135, 4
        %s137 = scalar_lea.vmem %s0, %s136
        %p138 = pneg %p37
        %p139 = pneg %p34
        %s140 = smul.u32 2, %s16
        %p141 = scmp.lt.s32.totalorder %s140, 7
        %s142 = scalar_select %p141, %s140, 7
        %s143 = smul.addr %s142, 8
        %s144 = scalar_lea.vmem %s1, %s143
        %p145 = pneg %p63
        %p146 = pneg %p60
        %p147 = pneg %p89
        %p148 = pneg %p86
        %s149 = sand.u32 %s76, 1
        %s150 = scalar_lea.sflag [#allocation3], %s149
        %s151 = sand.u32 %s76, 1
        %s152 = smul.addr %s151, 8
        %s153 = scalar_lea.vmem [#allocation2], %s152
        %s154 = smul.u32 2, %s16
        %p155 = scmp.lt.s32.totalorder %s154, 7
        %s156 = scalar_select %p155, %s154, 7
        %s157 = smul.addr %s156, 4
        %s158 = scalar_lea.vmem %s0, %s157
        %s159 = smul.u32 2, %s16
        %s160 = smul.u32 2, %s16
        %p161 = scmp.lt.s32.totalorder %s160, 7
        %s162 = scalar_select %p161, %s160, 7
        %s163 = smul.addr %s162, 8
        %s164 = scalar_lea.vmem %s1, %s163
        %s165 = smul.u32 2, %s16
        %v166 = vld [vmem:[%s158] sm:$0xf]
        %v167 = vld [vmem:[%s158 + $0x4] sm:$0xf]
        %v168 = vunpack.c.l.bf16 %v166
        %v169 = vunpack.c.l.bf16 %v167
        %v170 = vld [vmem:[%s164] sm:$0xff]
        %v171 = vld [vmem:[%s164 + $0x8] sm:$0xff]
        %vm172 = vcmask 130048
        %v173 = vsel %vm172, %v168, -inf
        %174 = vmax.xlane.f32.xlu0 %v173
        %v175 = vpop.xlane.xlu0 %174
        %v176 = vsel %vm172, %v169, -inf
        %177 = vmax.xlane.f32.xlu0 %v176
        %v178 = vpop.xlane.xlu0 %177
        %v179 = vsub.f32 %v168, %v175
        %v180 = vsub.f32 %v169, %v178
        %v181 = vmul.f32 %v179, 1.442695
        %v182 = vpow.pop %v181
        %v183 = vmul.f32 %v180, 1.442695
        %v184 = vpow.pop %v183
        %v185 = vlaneseq
        %v186 = vand.u32 %v185, 127
        %187 = vset.pattern.permute.xlu0 0
        %188 = vperm.xlu0 %187, %v170
        %v189 = vpop.permute.xlu0 %188
        %190 = vset.pattern.permute.xlu0 0
        %191 = vperm.xlu0 %190, %v171
        %v192 = vpop.permute.xlu0 %191
        %vm193 = vcmp.eq.s32.totalorder %v186, %v189
        %vm194 = vcmp.eq.s32.totalorder %v186, %v192
        %v195 = vsel %vm193, 1, 0
        %v196 = vsel %vm194, 1, 0
        %v197 = vcvt.s32.f32 %v195
        %v198 = vcvt.s32.f32 %v196
        %v199 = vsel %vm172, %v182, 0.0
        %200 = vadd.xlane.f32.xlu0 %v199
        %v201 = vpop.xlane.xlu0 %200
        %v202 = vsel %vm172, %v184, 0.0
        %203 = vadd.xlane.f32.xlu0 %v202
        %v204 = vpop.xlane.xlu0 %203
        %v205 = vmul.f32 %v182, %v197
        %v206 = vmul.f32 %v184, %v198
        %v207 = vsel %vm172, %v205, 0.0
        %208 = vadd.xlane.f32.xlu0 %v207
        %v209 = vpop.xlane.xlu0 %208
        %v210 = vsel %vm172, %v206, 0.0
        %211 = vadd.xlane.f32.xlu0 %v210
        %v212 = vpop.xlane.xlu0 %211
        %v213 = vmul.f32 %v168, %v197
        %v214 = vmul.f32 %v169, %v198
        %v215 = vsel %vm172, %v213, 0.0
        %216 = vadd.xlane.f32.xlu0 %v215
        %v217 = vpop.xlane.xlu0 %216
        %v218 = vsel %vm172, %v214, 0.0
        %219 = vadd.xlane.f32.xlu0 %v218
        %v220 = vpop.xlane.xlu0 %219
        %v221 = vlog2.pop %v201
        %v222 = vmul.f32 %v221, 0.6931472
        %v223 = vlog2.pop %v204
        %v224 = vmul.f32 %v223, 0.6931472
        %v225 = vadd.f32 %v222, %v175
        %v226 = vadd.f32 %v224, %v178
        %v227 = vsub.f32 %v225, %v217
        %v228 = vsub.f32 %v226, %v220
        %v229 = vrcp.pop %v201
        %v230 = vrcp.pop %v204
        %v231 = vmul.f32 %v209, %v229
        %v232 = vmul.f32 %v212, %v230
        %v233 = vsub.f32 1.0, %v231
        %v234 = vsub.f32 1.0, %v232
        %v235 = vmax.f32 %v233, 0.0
        %v236 = vmax.f32 %v234, 0.0
        %v237 = vmul.f32 %v235, %v235
        %v238 = vmul.f32 %v236, %v236
        %v239 = vmul.f32 %v237, %v227
        %v240 = vmul.f32 %v238, %v228
        %vm241 = vcmask 7168
        %v242 = vsel %vm241, %v239, 0.0
        %v243 = vsel %vm241, %v240, 0.0
        %v244 = vadd.f32 %v242, %v243
        %245 = vadd.xlane.f32.xlu0 %v244
        %v246 = vpop.xlane.xlu0 %245
        %v247 = vrot.slane %v246, 4
        %v248 = vadd.f32 %v246, %v247
        %v249 = vrot.slane %v248, 2
        %v250 = vadd.f32 %v248, %v249
        %v251 = vrot.slane %v250, 1
        %v252 = vadd.f32 %v250, %v251
        %s253 = vtos %v252
        %v254 = vstv %s253
        %255 = vst [vmem:[%s153] sm:$0xff] %v254
        %s256 = sand.u32 %s76, 1
        %s257 = scalar_lea.sflag [#allocation3], %s256
        %s258 = sand.u32 %s76, 1
        %s259 = smul.addr %s258, 8
        %s260 = scalar_lea.vmem [#allocation2], %s259
        // Predicated region
        $region29: #{tpu_custom_call.1} parent=27 // pred_check
          %p261 = pneg %p86
        $region30: #{tpu_custom_call.1} parent=27 // pred_check_branch
          %263 = sbr.rel (%p261) target = $region32
        $region31: #{tpu_custom_call.1} parent=27 // pred_region
          %265 = vsyncadd %s257, 0
          %s266 = smul.addr %s16, 8
          %s267 = scalar_lea.hbm %s2, %s266
          %s269 = sshll.u32 %s260, 4
          %s270 = int_to_ptr.vmem [resolvable:$true] %s269
          %s271 = sshll.u32 %s267, 4
          %s272 = int_to_ptr.hbm [resolvable:$true] %s271
          %274 = dma.vmem_to_hbm [thread:$0]  %s270, 128, %s272, %s257
        $region32: #{tpu_custom_call.1} parent=27 // pred_fallthru
          _
      $region28: #{tpu_custom_call.1} parent=5 // pred_fallthru
        _
      %p275 = scmp.le.s32.totalorder 2, %s11
      // Predicated region
      $region33: #{tpu_custom_call.1} parent=5 // pred_check
        %p276 = pneg %p275
      $region34: #{tpu_custom_call.1} parent=5 // pred_check_branch
        %278 = sbr.rel (%p276) target = $region36
      $region35: #{tpu_custom_call.1} parent=5 // pred_region
        %s279 = ssub.s32 %s11, 2
        // Predicated region
        $region37: #{tpu_custom_call.1} parent=35 // pred_check
          %p280 = pneg %p92
        $region38: #{tpu_custom_call.1} parent=35 // pred_check_branch
          %282 = sbr.rel (%p280) target = $region40
        $region39: #{tpu_custom_call.1} parent=35 // pred_region
          %s283 = sand.u32 %s77, 1
          %s284 = scalar_lea.sflag [#allocation3], %s283
          %s285 = sand.u32 %s77, 1
          %s286 = smul.addr %s285, 8
          %s287 = scalar_lea.vmem [#allocation2], %s286
          %289 = dma.done %s284, 128
        $region40: #{tpu_custom_call.1} parent=35 // pred_fallthru
          _
      $region36: #{tpu_custom_call.1} parent=5 // pred_fallthru
        _
    $region6: #{tpu_custom_call.1} parent=1 // loop_footer
      %s15 = sadd.s32 1, %s11
    $region7: #{tpu_custom_call.1} parent=1 // loop_footer_branch
      %10 = sbr.rel target = $region3
    $region8: #{tpu_custom_call.1} parent=1 // loop_exit
      _
    %290 = vsyncpa [#allocation3], 1
    %s291 = scalar_lea.sflag [#allocation3], 1
    %292 = vsyncpa %s291, 1

</llo_original>
